<compile_context>
chip_gen: v5e
topology: v5e:2x2
jax: 0.10.0
libtpu: 0.0.40
codegen_flags: <defaults>
</compile_context>

<pallas_src>
import functools

import jax
import jax.numpy as jnp
from jax import lax
from jax.experimental import pallas as pl
from jax.experimental.pallas import tpu as pltpu


# ----------------------------- hardware-derived sizing -----------------------------

def _vmem_capacity_bytes():
    try:
        v = getattr(pltpu.get_tpu_info(), "vmem_capacity_bytes", None)
        if v:
            return int(v)
    except Exception:
        pass
    return 64 << 20          # conservative fallback (v7x per-TensorCore VMEM)


def _num_tensorcores():
    try:
        kind = (jax.devices()[0].device_kind or "").lower()
        if "v7" in kind or "v4" in kind or "v5p" in kind:
            return 2
    except Exception:
        pass
    return 1


def _largest_divisor_leq(n, cap):
    cap = max(1, min(int(cap), n))
    best = 1
    for d in range(1, cap + 1):
        if n % d == 0:
            best = d
    return best


# ---------------------------------- kernel helpers ----------------------------------

def _masked_pool_sum_f32(x_ref, valid_len=None):
    """f32 sum over the last (lane) axis of an (Nb, C, L) block, keepdims -> (Nb, C, 1).

    Reads the ref in lane chunks so sub-f32 inputs never materialize a full-block f32
    temporary; `valid_len` (traced scalar) masks out-of-range lanes of a ragged tile."""
    nb, c, L = x_ref.shape
    if x_ref.dtype == jnp.float32:
        chunk = L                                   # no cast temporary; one-shot reduce
    else:
        chunk = max(128, (((1 << 20) // max(1, nb * c * 4)) // 128) * 128)

    def piece(lo, size):
        v = x_ref[:, :, lo:lo + size].astype(jnp.float32)
        if valid_len is not None:
            lane = lax.broadcasted_iota(jnp.int32, (nb, c, size), 2) + lo
            v = jnp.where(lane < valid_len, v, 0.0)
        return jnp.sum(v, axis=-1, keepdims=True)   # (Nb, C, 1)

    if chunk >= L:
        return piece(0, L)
    acc = jnp.zeros((nb, c, 1), jnp.float32)
    lo = 0
    while lo < L:
        size = min(chunk, L - lo)
        acc = acc + piece(lo, size)
        lo += size
    return acc


def _gate(pooled3, w1_ref, b1_ref, w2_ref, b2_ref, use_mxu):
    """pooled3: (Nb, C, 1) f32 channel means (channels on sublanes).
    Returns the sigmoid gate (Nb, C, 1) f32 in the same layout (lane-broadcast ready)."""
    if use_mxu:
        # Large C: run both 1x1 convs on the MXU.  The trailing-unit squeeze/expand only
        # relayouts Nb*C scalars once per block -- negligible next to the HW-sized block.
        pooled = pooled3[:, :, 0]                                        # (Nb, C)
        s1 = jnp.dot(pooled, w1_ref[...].astype(jnp.float32),
                     preferred_element_type=jnp.float32) + b1_ref[...]
        s1 = jnp.maximum(s1, 0.0)
        s2 = jnp.dot(s1, w2_ref[...].astype(jnp.float32),
                     preferred_element_type=jnp.float32) + b2_ref[...]
        return jax.nn.sigmoid(s2)[:, :, None]                            # (Nb, C, 1)
    # Small C: VPU path, channels stay on sublanes end-to-end (no relayouts).
    # w1_ref: (C, Cr), w2_ref: (C, Cr), b1_ref: (1, 1, Cr), b2_ref: (1, C, 1).
    t1 = pooled3 * w1_ref[...][None, :, :].astype(jnp.float32)           # (Nb, C, Cr)
    s1 = jnp.sum(t1, axis=1, keepdims=True) + b1_ref[...]                # (Nb, 1, Cr)
    s1 = jnp.maximum(s1, 0.0)
    t2 = s1 * w2_ref[...][None, :, :].astype(jnp.float32)                # (Nb, C, Cr)
    s2 = jnp.sum(t2, axis=-1, keepdims=True) + b2_ref[...]               # (Nb, C, 1)
    return jax.nn.sigmoid(s2)


# ------------------------------------- kernels --------------------------------------

def _fused_kernel(x_ref, w1_ref, b1_ref, w2_ref, b2_ref, o_ref, *, inv_hw, use_mxu):
    # x block: (Nb, C, HW), HW on lanes -- pool + gate + scale in one pass (1R + 1W).
    pooled3 = _masked_pool_sum_f32(x_ref) * inv_hw                       # (Nb, C, 1) f32
    g = _gate(pooled3, w1_ref, b1_ref, w2_ref, b2_ref, use_mxu)          # (Nb, C, 1) f32
    g = g.astype(x_ref.dtype)          # bf16 multiply on bf16-VALU chips; no-op for f32
    o_ref[...] = (x_ref[...] * g).astype(o_ref.dtype)


def _pool_gate_kernel(x_ref, w1_ref, b1_ref, w2_ref, b2_ref, gate_ref, *,
                      inv_hw, hw, hw_block, use_mxu):
    # Grid (N, hw_tiles); gate_ref (1, C, 1) is the resident f32 accumulator across tiles
    # (kept f32 for accumulation precision; pass 2 casts it to x.dtype per block).
    t = pl.program_id(1)

    @pl.when(t == 0)
    def _init():
        gate_ref[...] = jnp.zeros_like(gate_ref)

    # Mask the tail lanes of the last tile when hw_block does not divide HW (zeros do not
    # perturb the sum; the mean divides by the TRUE HW below).
    valid = (hw - t * hw_block) if (hw % hw_block) != 0 else None
    gate_ref[...] += _masked_pool_sum_f32(x_ref, valid_len=valid)

    @pl.when(t == pl.num_programs(1) - 1)
    def _finalize():
        pooled3 = gate_ref[...] * inv_hw
        g = _gate(pooled3, w1_ref, b1_ref, w2_ref, b2_ref, use_mxu)
        gate_ref[...] = g.astype(gate_ref.dtype)


def _scale_kernel(x_ref, gate_ref, o_ref):
    # (1, C, hw_tile) * (1, C, 1): per-channel gate, lane broadcast, lane-dense stores.
    g = gate_ref[...].astype(x_ref.dtype)
    o_ref[...] = (x_ref[...] * g).astype(o_ref.dtype)


# ------------------------------------- wrapper ---------------------------------------

def se_module_pallas(x_nchw, w1, b1, w2, b2, *, force_two_pass=False,
                     hw_block=None, hw_block_pool=None, donate_x=False):
    """SE forward.  x_nchw: (N, C, H, W); w1: (Cr, C, 1, 1); b1: (Cr,);
    w2: (C, Cr, 1, 1); b2: (C,)   (PyTorch Conv2d 1x1 layouts)."""
    N, C, H, W = x_nchw.shape
    HW = H * W
    Cr = w1.shape[0]
    dt = x_nchw.dtype
    itemsize = jnp.dtype(dt).itemsize
    inv_hw = 1.0 / float(HW)
    use_mxu = (C >= 128) and (Cr >= 16)

    # NCHW-native: (N, C, HW) is a free, contiguous reshape (no HBM traffic).
    x = x_nchw.reshape(N, C, HW)

    # Weight layout plumbing (tiny tensors; negligible traffic).
    if use_mxu:
        w1k = w1.reshape(Cr, C).T          # (C, Cr): pooled @ w1k on the MXU
        w2k = w2.reshape(C, Cr).T          # (Cr, C)
        b1k = b1.reshape(1, Cr)
        b2k = b2.reshape(1, C)
    else:
        w1k = w1.reshape(Cr, C).T          # (C, Cr): channels on sublanes for the VPU path
        w2k = w2.reshape(C, Cr)            # (C, Cr)
        b1k = b1.reshape(1, 1, Cr)
        b2k = b2.reshape(1, C, 1)
    weight_ops = (w1k, b1k, w2k, b2k)

    def _const_spec(a, grid_rank):
        zeros = (0,) * a.ndim
        if grid_rank == 1:
            return pl.BlockSpec(a.shape, lambda n: zeros)
        return pl.BlockSpec(a.shape, lambda n, t: zeros)

    # ---- per-generation sizing (derived from the chip's VMEM capacity) ----
    vmem_cap = _vmem_capacity_bytes()
    usable_vmem = int(vmem_cap * 0.8)                  # scheduler / scratch headroom
    n_tc = _num_tensorcores()
    weights_bytes = 2 * 4 * (2 * C * Cr + C + Cr)      # double-buffered weights + biases
    headroom = 6 << 20
    # Fused plan holds double-buffered in + out blocks (4x block) plus the weights.
    fused_block_cap = max(2 << 20, (usable_vmem - weights_bytes - headroom) // 4)
    target_block = (4 << 20) if vmem_cap >= (96 << 20) else (2 << 20)
    target_block = min(target_block, fused_block_cap)

    bytes_per_sample = C * HW * itemsize

    if (not force_two_pass) and bytes_per_sample <= fused_block_cap:
        # ---- fused single pass: pool + gate + scale, 1 read + 1 write of x ----
        cap = max(1, target_block // max(1, bytes_per_sample))
        if n_tc > 1 and N >= n_tc:
            cap = min(cap, max(1, N // n_tc))   # keep >= n_tc parallel steps (2-TC chips)
        nb = _largest_divisor_leq(N, cap)
        block_bytes = nb * bytes_per_sample
        vmem_limit = min(max(32 << 20, 4 * block_bytes + weights_bytes + headroom),
                         usable_vmem)
        kernel = functools.partial(_fused_kernel, inv_hw=inv_hw, use_mxu=use_mxu)
        out = pl.pallas_call(
            kernel,
            out_shape=jax.ShapeDtypeStruct((N, C, HW), dt),
            grid=(N // nb,),
            in_specs=[pl.BlockSpec((nb, C, HW), lambda n: (n, 0, 0))]
                     + [_const_spec(a, 1) for a in weight_ops],
            out_specs=pl.BlockSpec((nb, C, HW), lambda n: (n, 0, 0)),
            compiler_params=pltpu.CompilerParams(
                dimension_semantics=("parallel",),
                vmem_limit_bytes=vmem_limit),
        )(x, *weight_ops)
    else:
        # ---- two-pass tiled plan (samples too big for VMEM) ----
        row_bytes = C * itemsize

        def _lane_tile(t):
            t = int(t)
            if t >= HW:
                return HW
            return max(128, -(-t // 128) * 128)        # round up to a lane multiple

        if hw_block is None:
            hw_block = max(128, target_block // max(1, row_bytes))
        hw_block = _lane_tile(hw_block)
        if hw_block_pool is None:
            # Pass 1 only holds the double-buffered input tile (+ a (1,C,1) accumulator),
            # so its tiles can be ~2x bigger than pass 2's (which double-buffers in+out).
            pool_cap = max(128, ((usable_vmem - weights_bytes - headroom) // 2)
                           // max(1, row_bytes))
            hw_block_pool = min(2 * hw_block, pool_cap)
        hw_block_pool = _lane_tile(hw_block_pool)

        n_hw1 = pl.cdiv(HW, hw_block_pool)
        n_hw2 = pl.cdiv(HW, hw_block)
        block1 = C * hw_block_pool * itemsize
        block2 = C * hw_block * itemsize
        vmem1 = min(max(32 << 20, 2 * block1 + weights_bytes + headroom), usable_vmem)
        vmem2 = min(max(32 << 20, 4 * block2 + headroom), usable_vmem)

        # Pass 1: accumulate the pooled sum over lane tiles (output block is the
        # accumulator), compute the per-channel gate at the last tile.
        # Note: for N < num_tensorcores on 2-TC chips, pass 1 leaves one core idle; a
        # leading parallel HW-split axis + tiny combine epilogue would recover it.
        kernel1 = functools.partial(_pool_gate_kernel, inv_hw=inv_hw, hw=HW,
                                    hw_block=hw_block_pool, use_mxu=use_mxu)
        gate = pl.pallas_call(
            kernel1,
            out_shape=jax.ShapeDtypeStruct((N, C, 1), jnp.float32),
            grid=(N, n_hw1),
            in_specs=[pl.BlockSpec((1, C, hw_block_pool), lambda n, t: (n, 0, t))]
                     + [_const_spec(a, 2) for a in weight_ops],
            out_specs=pl.BlockSpec((1, C, 1), lambda n, t: (n, 0, 0)),
            compiler_params=pltpu.CompilerParams(
                dimension_semantics=("parallel", "arbitrary"),
                vmem_limit_bytes=vmem1),
        )(x, *weight_ops)

        # Pass 2: fully parallel elementwise scale, streamed in lane-dense tiles.
        out = pl.pallas_call(
            _scale_kernel,
            out_shape=jax.ShapeDtypeStruct((N, C, HW), dt),
            grid=(N, n_hw2),
            in_specs=[
                pl.BlockSpec((1, C, hw_block), lambda n, t: (n, 0, t)),
                pl.BlockSpec((1, C, 1), lambda n, t: (n, 0, 0)),
            ],
            out_specs=pl.BlockSpec((1, C, hw_block), lambda n, t: (n, 0, t)),
            compiler_params=pltpu.CompilerParams(
                dimension_semantics=("parallel", "parallel"),
                vmem_limit_bytes=vmem2),
            input_output_aliases={0: 0} if donate_x else {},
        )(x, gate)

    return out.reshape(N, C, H, W)     # free reshape back to NCHW


def se_module_ref(x, w1, b1, w2, b2):
    """Pure-JAX reference (matches PyTorch SEModule forward)."""
    N, C, H, W = x.shape
    Cr = w1.shape[0]
    pooled = jnp.mean(x, axis=(2, 3))                                  # (N, C)
    s1 = jnp.maximum(pooled @ w1.reshape(Cr, C).T + b1, 0.0)           # (N, Cr)
    s2 = jax.nn.sigmoid(s1 @ w2.reshape(C, Cr).T + b2)                 # (N, C)
    return x * s2[:, :, None, None]


if __name__ == "__main__":
    # Small shapes consistent with the module: batch=2, channels=4, reduction=2, 16x16.
    N, C, H, W = 2, 4, 16, 16
    reduction = 2
    Cr = C // reduction

    key = jax.random.PRNGKey(0)
    kx, kx2, kw1, kb1, kw2, kb2 = jax.random.split(key, 6)
    x  = jax.random.normal(kx,  (N, C, H, W), dtype=jnp.float32)
    w1 = jax.random.normal(kw1, (Cr, C, 1, 1), dtype=jnp.float32) * 0.1
    b1 = jax.random.normal(kb1, (Cr,),         dtype=jnp.float32) * 0.1
    w2 = jax.random.normal(kw2, (C, Cr, 1, 1), dtype=jnp.float32) * 0.1
    b2 = jax.random.normal(kb2, (C,),          dtype=jnp.float32) * 0.1

    ref = se_module_ref(x, w1, b1, w2, b2)

    # Fused single-pass plan (auto-selected at these shapes).
    out_fused = jax.block_until_ready(se_module_pallas(x, w1, b1, w2, b2))
    assert out_fused.shape == (N, C, H, W)
    assert jnp.allclose(out_fused, ref, atol=1e-5, rtol=1e-5), "fused path mismatch"

    # Two-pass tiled plan, even split (HW=256, tiles of 128): exercises the cross-tile
    # pooled-sum accumulation and the separate scale pass.
    out_2p = jax.block_until_ready(
        se_module_pallas(x, w1, b1, w2, b2, force_two_pass=True,
                         hw_block=128, hw_block_pool=128))
    assert jnp.allclose(out_2p, ref, atol=1e-5, rtol=1e-5), "two-pass path mismatch"

    # Two-pass tiled plan, ragged split (HW=400 with tiles of 128): exercises the masked
    # last pooling tile and the dropped out-of-bounds output lanes.
    H2 = W2 = 20
    x2 = jax.random.normal(kx2, (N, C, H2, W2), dtype=jnp.float32)
    ref2 = se_module_ref(x2, w1, b1, w2, b2)
    out_2pr = jax.block_until_ready(
        se_module_pallas(x2, w1, b1, w2, b2, force_two_pass=True,
                         hw_block=128, hw_block_pool=128))
    assert jnp.allclose(out_2pr, ref2, atol=1e-5, rtol=1e-5), "ragged two-pass mismatch"

    print("KERNEL_OK")
</pallas_src>

<mosaic_0001>
module attributes {stable_mosaic.version = 11 : i64} {
  func.func @_fused_kernel(%arg0: i32, %arg1: memref<2x4x256xf32, #tpu.memory_space<vmem>>, %arg2: memref<4x2xf32, #tpu.memory_space<vmem>>, %arg3: memref<1x1x2xf32, #tpu.memory_space<vmem>>, %arg4: memref<4x2xf32, #tpu.memory_space<vmem>>, %arg5: memref<1x4x1xf32, #tpu.memory_space<vmem>>, %arg6: memref<2x4x256xf32, #tpu.memory_space<vmem>>) attributes {dimension_semantics = [#tpu.dimension_semantics<parallel>], iteration_bounds = array<i64: 1>, scalar_prefetch = 0 : i64, scratch_operands = 0 : i64, tpu.core_type = #tpu.core_type<tc>, window_params = [{transform_indices = @transform_0, window_bounds = array<i64: 2, 4, 256>}, {pipeline_mode = #tpu.pipeline_mode<synchronous>, transform_indices = @transform_1, window_bounds = array<i64: 4, 2>}, {pipeline_mode = #tpu.pipeline_mode<synchronous>, transform_indices = @transform_2, window_bounds = array<i64: 1, 1, 2>}, {pipeline_mode = #tpu.pipeline_mode<synchronous>, transform_indices = @transform_3, window_bounds = array<i64: 4, 2>}, {pipeline_mode = #tpu.pipeline_mode<synchronous>, transform_indices = @transform_4, window_bounds = array<i64: 1, 4, 1>}, {transform_indices = @transform_5, window_bounds = array<i64: 2, 4, 256>}]} {
    %c0 = arith.constant 0 : index
    %c0_0 = arith.constant 0 : index
    %c0_1 = arith.constant 0 : index
    %0 = vector.load %arg1[%c0, %c0_0, %c0_1] : memref<2x4x256xf32, #tpu.memory_space<vmem>>, vector<2x4x256xf32>
    %cst = arith.constant dense<0.000000e+00> : vector<2x4xf32>
    %1 = vector.multi_reduction <add>, %0, %cst [2] : vector<2x4x256xf32> to vector<2x4xf32>
    %2 = vector.shape_cast %1 : vector<2x4xf32> to vector<2x4x1xf32>
    %cst_2 = arith.constant 3.906250e-03 : f32
    %3 = vector.broadcast %cst_2 : f32 to vector<2x4x1xf32>
    %4 = arith.mulf %2, %3 : vector<2x4x1xf32>
    %c0_3 = arith.constant 0 : index
    %c0_4 = arith.constant 0 : index
    %5 = vector.load %arg2[%c0_3, %c0_4] : memref<4x2xf32, #tpu.memory_space<vmem>>, vector<4x2xf32>
    %6 = vector.shape_cast %5 : vector<4x2xf32> to vector<1x4x2xf32>
    %7 = vector.broadcast %4 : vector<2x4x1xf32> to vector<2x4x2xf32>
    %8 = vector.broadcast %6 : vector<1x4x2xf32> to vector<2x4x2xf32>
    %9 = arith.mulf %7, %8 : vector<2x4x2xf32>
    %cst_5 = arith.constant dense<0.000000e+00> : vector<2x2xf32>
    %10 = vector.multi_reduction <add>, %9, %cst_5 [1] : vector<2x4x2xf32> to vector<2x2xf32>
    %11 = vector.shape_cast %10 : vector<2x2xf32> to vector<2x1x2xf32>
    %c0_6 = arith.constant 0 : index
    %c0_7 = arith.constant 0 : index
    %c0_8 = arith.constant 0 : index
    %12 = vector.load %arg3[%c0_6, %c0_7, %c0_8] : memref<1x1x2xf32, #tpu.memory_space<vmem>>, vector<1x1x2xf32>
    %13 = vector.broadcast %12 : vector<1x1x2xf32> to vector<2x1x2xf32>
    %14 = arith.addf %11, %13 : vector<2x1x2xf32>
    %cst_9 = arith.constant 0.000000e+00 : f32
    %15 = vector.broadcast %cst_9 : f32 to vector<2x1x2xf32>
    %16 = arith.maximumf %14, %15 : vector<2x1x2xf32>
    %c0_10 = arith.constant 0 : index
    %c0_11 = arith.constant 0 : index
    %17 = vector.load %arg4[%c0_10, %c0_11] : memref<4x2xf32, #tpu.memory_space<vmem>>, vector<4x2xf32>
    %18 = vector.shape_cast %17 : vector<4x2xf32> to vector<1x4x2xf32>
    %19 = vector.broadcast %16 : vector<2x1x2xf32> to vector<2x4x2xf32>
    %20 = vector.broadcast %18 : vector<1x4x2xf32> to vector<2x4x2xf32>
    %21 = arith.mulf %19, %20 : vector<2x4x2xf32>
    %cst_12 = arith.constant dense<0.000000e+00> : vector<2x4xf32>
    %22 = vector.multi_reduction <add>, %21, %cst_12 [2] : vector<2x4x2xf32> to vector<2x4xf32>
    %23 = vector.shape_cast %22 : vector<2x4xf32> to vector<2x4x1xf32>
    %c0_13 = arith.constant 0 : index
    %c0_14 = arith.constant 0 : index
    %c0_15 = arith.constant 0 : index
    %24 = vector.load %arg5[%c0_13, %c0_14, %c0_15] : memref<1x4x1xf32, #tpu.memory_space<vmem>>, vector<1x4x1xf32>
    %25 = vector.broadcast %24 : vector<1x4x1xf32> to vector<2x4x1xf32>
    %26 = arith.addf %23, %25 : vector<2x4x1xf32>
    %27 = arith.negf %26 : vector<2x4x1xf32>
    %28 = math.exp %27 : vector<2x4x1xf32>
    %cst_16 = arith.constant 1.000000e+00 : f32
    %29 = vector.broadcast %cst_16 : f32 to vector<2x4x1xf32>
    %30 = arith.addf %29, %28 : vector<2x4x1xf32>
    %31 = arith.divf %29, %30 : vector<2x4x1xf32>
    %c0_17 = arith.constant 0 : index
    %c0_18 = arith.constant 0 : index
    %c0_19 = arith.constant 0 : index
    %32 = vector.load %arg1[%c0_17, %c0_18, %c0_19] : memref<2x4x256xf32, #tpu.memory_space<vmem>>, vector<2x4x256xf32>
    %33 = vector.broadcast %31 : vector<2x4x1xf32> to vector<2x4x256xf32>
    %34 = arith.mulf %32, %33 : vector<2x4x256xf32>
    %c0_20 = arith.constant 0 : index
    %c0_21 = arith.constant 0 : index
    %c0_22 = arith.constant 0 : index
    %35 = vector.load %arg6[%c0_20, %c0_21, %c0_22] : memref<2x4x256xf32, #tpu.memory_space<vmem>>, vector<2x4x256xf32>
    tpu.vector_store %arg6[%c0_20, %c0_21, %c0_22], %34 {strides = array<i32>} : memref<2x4x256xf32, #tpu.memory_space<vmem>>, vector<2x4x256xf32>,
    return
  }
  func.func @transform_0(%arg0: i32) -> (i32, i32, i32) {
    %c0_i32 = arith.constant 0 : i32
    %c0_i32_0 = arith.constant 0 : i32
    %c0_i32_1 = arith.constant 0 : i32
    return %arg0, %c0_i32, %c0_i32_0 : i32, i32, i32
  }
  func.func @transform_1(%arg0: i32) -> (i32, i32) {
    %c0_i32 = arith.constant 0 : i32
    %c0_i32_0 = arith.constant 0 : i32
    %c0_i32_1 = arith.constant 0 : i32
    return %c0_i32, %c0_i32_0 : i32, i32
  }
  func.func @transform_2(%arg0: i32) -> (i32, i32, i32) {
    %c0_i32 = arith.constant 0 : i32
    %c0_i32_0 = arith.constant 0 : i32
    %c0_i32_1 = arith.constant 0 : i32
    %c0_i32_2 = arith.constant 0 : i32
    return %c0_i32, %c0_i32_0, %c0_i32_1 : i32, i32, i32
  }
  func.func @transform_3(%arg0: i32) -> (i32, i32) {
    %c0_i32 = arith.constant 0 : i32
    %c0_i32_0 = arith.constant 0 : i32
    %c0_i32_1 = arith.constant 0 : i32
    return %c0_i32, %c0_i32_0 : i32, i32
  }
  func.func @transform_4(%arg0: i32) -> (i32, i32, i32) {
    %c0_i32 = arith.constant 0 : i32
    %c0_i32_0 = arith.constant 0 : i32
    %c0_i32_1 = arith.constant 0 : i32
    %c0_i32_2 = arith.constant 0 : i32
    return %c0_i32, %c0_i32_0, %c0_i32_1 : i32, i32, i32
  }
  func.func @transform_5(%arg0: i32) -> (i32, i32, i32) {
    %c0_i32 = arith.constant 0 : i32
    %c0_i32_0 = arith.constant 0 : i32
    %c0_i32_1 = arith.constant 0 : i32
    return %arg0, %c0_i32, %c0_i32_0 : i32, i32, i32
  }
}

</mosaic_0001>

<llo_original>
// kernel: tpu_custom_call.1
$region0: #{tpu_custom_call.1}
  #allocation0 [shape = 'u32[]', space=smem, size = 0x4, offset = 0x4, fixed_abs, tag = 'smem constant byte address 0x4 - core index']
  #allocation1 [shape = 'u32[72,128]{1,0:T(1,128)}', space=vmem, size = 0x9000, scoped, tag = 'internal scratch']
  %s0 = inlined_call_operand.hbm [shape: f32[2,4,256], index: 0, kind: input, shape index: {}]
  %s1 = inlined_call_operand.vmem [shape: f32[4,2], index: 1, kind: input, shape index: {}]
  %s2 = inlined_call_operand.vmem [shape: f32[1,1,2], index: 2, kind: input, shape index: {}]
  %s3 = inlined_call_operand.vmem [shape: f32[4,2], index: 3, kind: input, shape index: {}]
  %s4 = inlined_call_operand.vmem [shape: f32[1,4,1], index: 4, kind: input, shape index: {}]
  %s5 = inlined_call_operand.hbm [shape: f32[2,4,256], index: 5, kind: output, shape index: {}]
  %s6 = sld [smem:[#allocation0]]
  $region34: #{tpu_custom_call.1} parent=0
    _
  %s8 = ssub.s32 1, %s6
  %s9 = scalar_select 0, %s8, %s6
  $region1: #{tpu_custom_call.1} parent=0
    #allocation2 [shape = 'u8[8192]{0}', space=vmem, size = 0x2000, scoped, tag = 'input window, operand 0, single buffered']
    #allocation3 [shape = 's32[1]{0}', space=sflag, size = 0x4, scoped, tag = 'scoped memory for tpu_custom_call.1']
    #allocation4 [shape = 's32[1]{0}', space=sflag, size = 0x4, scoped, tag = 'scoped memory for tpu_custom_call.1']
    #allocation5 [shape = 'u8[8192]{0}', space=vmem, size = 0x2000, scoped, tag = 'output window, operand 0, single buffered']
    %10 = vsyncpa [#allocation3], 0
    %11 = vsyncpa [#allocation4], 0
    // Predicated region
    $region2: #{tpu_custom_call.1} parent=1 // pred_check
      _
    $region3: #{tpu_custom_call.1} parent=1 // pred_check_branch
      %13 = sbr.rel (0) target = $region5
    $region4: #{tpu_custom_call.1} parent=1 // pred_region
      %15 = vsyncadd [#allocation3], 0
      %s16 = sshll.u32 %s0, 4
      %s17 = int_to_ptr.hbm [resolvable:$true] %s16
      %s18 = sshll.u32 [#allocation2], 4
      %s19 = int_to_ptr.vmem [resolvable:$true] %s18
      %24 = dma.hbm_to_vmem [thread:$0]  %s17, 256, %s19, [#allocation3], 128, 128, 8
    $region5: #{tpu_custom_call.1} parent=1 // pred_fallthru
      _
    // Predicated region
    $region6: #{tpu_custom_call.1} parent=1 // pred_check
      _
    $region7: #{tpu_custom_call.1} parent=1 // pred_check_branch
      %26 = sbr.rel (0) target = $region9
    $region8: #{tpu_custom_call.1} parent=1 // pred_region
      _
    $region9: #{tpu_custom_call.1} parent=1 // pred_fallthru
      _
    // Predicated region
    $region10: #{tpu_custom_call.1} parent=1 // pred_check
      _
    $region11: #{tpu_custom_call.1} parent=1 // pred_check_branch
      %28 = sbr.rel (0) target = $region13
    $region12: #{tpu_custom_call.1} parent=1 // pred_region
      _
    $region13: #{tpu_custom_call.1} parent=1 // pred_fallthru
      _
    // Predicated region
    $region14: #{tpu_custom_call.1} parent=1 // pred_check
      _
    $region15: #{tpu_custom_call.1} parent=1 // pred_check_branch
      %30 = sbr.rel (0) target = $region17
    $region16: #{tpu_custom_call.1} parent=1 // pred_region
      _
    $region17: #{tpu_custom_call.1} parent=1 // pred_fallthru
      _
    // Predicated region
    $region18: #{tpu_custom_call.1} parent=1 // pred_check
      _
    $region19: #{tpu_custom_call.1} parent=1 // pred_check_branch
      %32 = sbr.rel (0) target = $region21
    $region20: #{tpu_custom_call.1} parent=1 // pred_region
      _
    $region21: #{tpu_custom_call.1} parent=1 // pred_fallthru
      _
    // Predicated region
    $region22: #{tpu_custom_call.1} parent=1 // pred_check
      _
    $region23: #{tpu_custom_call.1} parent=1 // pred_check_branch
      %34 = sbr.rel (0) target = $region25
    $region24: #{tpu_custom_call.1} parent=1 // pred_region
      %36 = dma.done [#allocation3], 256
    $region25: #{tpu_custom_call.1} parent=1 // pred_fallthru
      _
    %v37 = vld [vmem:[#allocation2] sm:$0xff]
    %v38 = vld [vmem:[#allocation2 + $0x8] sm:$0xff]
    %41 = vst [vmem:[#allocation1] ss:$2 sm:$0xff] %v37
    %v42 = vld.sshfl [vmem:[#allocation1] sm:$0xff pattern:$0x75316420]
    %v43 = vld.sshfl [vmem:[#allocation1 + $0x8] sm:$0xff pattern:$0x75316420]
    %s44 = scalar_lea.vmem [#allocation1], 16
    %45 = vst [vmem:[%s44] ss:$2 sm:$0xff] %v38
    %v46 = vld.sshfl [vmem:[#allocation1 + $0x10] sm:$0xff pattern:$0x75316420]
    %v47 = vld.sshfl [vmem:[#allocation1 + $0x18] sm:$0xff pattern:$0x75316420]
    %vm52 = vcmask 1043456
    %v53 = vsel %vm52, %v42, 0.0
    %v54 = vsel %vm52, %v43, 0.0
    %v55 = vadd.f32 %v53, %v54
    %56 = vadd.xlane.f32.xlu0 %v55
    %v57 = vpop.xlane.xlu0 %56
    %v58 = vsel %vm52, %v46, 0.0
    %v59 = vsel %vm52, %v47, 0.0
    %v60 = vadd.f32 %v58, %v59
    %61 = vadd.xlane.f32.xlu0 %v60
    %v62 = vpop.xlane.xlu0 %61
    %v63 = vmul.f32 %v57, 0.00390625
    %v64 = vmul.f32 %v62, 0.00390625
    %v65 = vld [vmem:[%s1] sm:$0xf]
    %v66 = vmul.f32 %v63, %v65
    %v67 = vmul.f32 %v64, %v65
    %vm68 = vcmask 11264
    %v69 = vsel %vm68, %v66, 0.0
    %v70 = vrot.slane %v69, 4
    %v71 = vadd.f32 %v69, %v70
    %v72 = vrot.slane %v71, 2
    %v73 = vadd.f32 %v71, %v72
    %v74 = vrot.slane %v73, 1
    %v75 = vadd.f32 %v73, %v74
    %v76 = vsel %vm68, %v67, 0.0
    %v77 = vrot.slane %v76, 4
    %v78 = vadd.f32 %v76, %v77
    %v79 = vrot.slane %v78, 2
    %v80 = vadd.f32 %v78, %v79
    %v81 = vrot.slane %v80, 1
    %v82 = vadd.f32 %v80, %v81
    %v83 = vld [vmem:[%s2] sm:$0x1]
    %v84 = vadd.f32 %v75, %v83
    %v85 = vadd.f32 %v82, %v83
    %v86 = vmax.f32 %v84, 0.0
    %v87 = vmax.f32 %v85, 0.0
    %v88 = vld [vmem:[%s3] sm:$0xf]
    %v89 = vperm.slane %v86, 0
    %v90 = vperm.slane %v87, 0
    %v91 = vmul.f32 %v89, %v88
    %v92 = vmul.f32 %v90, %v88
    %v93 = vsel %vm68, %v91, 0.0
    %94 = vadd.xlane.f32.xlu0 %v93
    %v95 = vpop.xlane.xlu0 %94
    %v96 = vsel %vm68, %v92, 0.0
    %97 = vadd.xlane.f32.xlu0 %v96
    %v98 = vpop.xlane.xlu0 %97
    %v99 = vld [vmem:[%s4] sm:$0xf]
    %v100 = vadd.f32 %v95, %v99
    %v101 = vadd.f32 %v98, %v99
    %v102 = vxor.u32 %v100, 2147483648
    %v103 = vxor.u32 %v101, 2147483648
    %v104 = vmul.f32 %v102, 1.442695
    %v105 = vpow.pop %v104
    %v106 = vmul.f32 %v103, 1.442695
    %v107 = vpow.pop %v106
    %v108 = vadd.f32 %v105, 1.0
    %v109 = vadd.f32 %v107, 1.0
    %v110 = vrcp.pop %v108
    %v111 = vmul.f32 %v108, %v110
    %v112 = vsub.f32 1.0, %v111
    %v113 = vmul.f32 %v110, %v112
    %v114 = vadd.f32 %v110, %v113
    %vm115 = vweird.f32 %v108
    %vm116 = vweird.f32 %v110
    %vm117 = vmor %vm115, %vm116
    %v118 = vsel %vm117, %v110, %v114
    %v119 = vand.u32 2147483647, %v108
    %vm120 = vcmp.eq.f32.partialorder %v119, 8.507059e+37
    %v121 = vand.u32 %v108, 2147483648
    %v122 = vor.u32 1.1754944e-38, %v121
    %v123 = vsel %vm120, %v122, %v118
    %v124 = vmul.f32 1.0, %v123
    %v125 = vrcp.pop %v109
    %v126 = vmul.f32 %v109, %v125
    %v127 = vsub.f32 1.0, %v126
    %v128 = vmul.f32 %v125, %v127
    %v129 = vadd.f32 %v125, %v128
    %vm130 = vweird.f32 %v109
    %vm131 = vweird.f32 %v125
    %vm132 = vmor %vm130, %vm131
    %v133 = vsel %vm132, %v125, %v129
    %v134 = vand.u32 2147483647, %v109
    %vm135 = vcmp.eq.f32.partialorder %v134, 8.507059e+37
    %v136 = vand.u32 %v109, 2147483648
    %v137 = vor.u32 1.1754944e-38, %v136
    %v138 = vsel %vm135, %v137, %v133
    %v139 = vmul.f32 1.0, %v138
    %141 = vset.pattern.permute.xlu0 0
    %142 = vperm.xlu0 %141, %v124
    %v143 = vpop.permute.xlu0 %142
    %145 = vset.pattern.permute.xlu0 0
    %146 = vperm.xlu0 %145, %v139
    %v147 = vpop.permute.xlu0 %146
    %v149 = vunpack.c.l.s4 839922192
    %v150 = vunpack.c.0.s8 %v149
    %v151 = vperm.slane %v143, %v150
    %v153 = vunpack.c.l.s4 839922192
    %v154 = vunpack.c.0.s8 %v153
    %v155 = vperm.slane %v147, %v154
    %v158 = vmul.f32 %v37, %v151
    %v159 = vmul.f32 %v38, %v155
    %160 = vst [vmem:[#allocation5] sm:$0xff] %v158
    %161 = vst [vmem:[#allocation5 + $0x8] sm:$0xff] %v159
    // Predicated region
    $region26: #{tpu_custom_call.1} parent=1 // pred_check
      _
    $region27: #{tpu_custom_call.1} parent=1 // pred_check_branch
      %163 = sbr.rel (0) target = $region29
    $region28: #{tpu_custom_call.1} parent=1 // pred_region
      %165 = vsyncadd [#allocation4], 0
      %s166 = sshll.u32 [#allocation5], 4
      %s167 = int_to_ptr.vmem [resolvable:$true] %s166
      %s168 = sshll.u32 %s5, 4
      %s169 = int_to_ptr.hbm [resolvable:$true] %s168
      %174 = dma.vmem_to_hbm [thread:$0]  %s167, 256, %s169, [#allocation4], 128, 128, 8
    $region29: #{tpu_custom_call.1} parent=1 // pred_fallthru
      _
    // Predicated region
    $region30: #{tpu_custom_call.1} parent=1 // pred_check
      _
    $region31: #{tpu_custom_call.1} parent=1 // pred_check_branch
      %176 = sbr.rel (0) target = $region33
    $region32: #{tpu_custom_call.1} parent=1 // pred_region
      %178 = dma.done [#allocation4], 256
    $region33: #{tpu_custom_call.1} parent=1 // pred_fallthru
      _
    %179 = vsyncpa [#allocation3], 1
    %180 = vsyncpa [#allocation4], 1

</llo_original>
